<compile_context>
chip_gen: v5e
topology: v5e:2x2
jax: 0.10.0
libtpu: 0.0.40
codegen_flags: <defaults>
</compile_context>

<pallas_src>
import math

import jax
import jax.numpy as jnp
import numpy as np
from jax.experimental import pallas as pl
from jax.experimental.pallas import tpu as pltpu

MODEL_DIM = 32
NUM_HEADS = 2
HEAD_DIM = MODEL_DIM // NUM_HEADS
EPS = 1e-5          # nn.LayerNorm default eps
NEG_INF = -1e30     # boolean attn-mask fill used by the reference
MASK_BIG = 1e30


def _round_up(x, m):
    return -(-x // m) * m


def mha_block_kernel(q_ref, kv_ref, mask_ref, w_ref, vec_ref, o_ref):
    """One grid step processes `TB` batch elements.

    q_ref   : (TB*Sq,  D)   flattened query rows
    kv_ref  : (TB*Skv, D)   flattened key/value rows
    mask_ref: (1, TB, Skv)  float {0,1} kv padding mask
    w_ref   : (D, 4D)       [Wq | Wk | Wv | Wo]  lane-dense slab
    vec_ref : (6, D)        [bq; bk; bv; bo; ln_g; ln_b]
    o_ref   : (1, TB, Sq*D) lane-dense output slab, or (TB*Sq, D) fallback
    """
    _, TB, Skv = mask_ref.shape
    RQ, D = q_ref.shape
    Sq = RQ // TB
    H = NUM_HEADS
    hd = D // H
    scale = 1.0 / math.sqrt(hd)

    w_bf = w_ref[...].astype(jnp.bfloat16)           # (D, 4D)
    vec = vec_ref[...]                                # (6, D) f32

    # Projections: one wide (4D = 128 lane) MXU pass per sequence, bf16 operands,
    # fp32 accumulation.
    q_all = jnp.dot(q_ref[...].astype(jnp.bfloat16), w_bf,
                    preferred_element_type=jnp.float32)            # (RQ, 4D)
    kv_all = jnp.dot(kv_ref[...].astype(jnp.bfloat16), w_bf,
                     preferred_element_type=jnp.float32)           # (RK, 4D)

    # Biases, softmax scale folded into q, split per stream.  Sq/Skv are padded
    # to multiples of 8 in the wrapper so these reshapes are layout views.
    qp = ((q_all[:, 0:D] + vec[0:1]) * scale).reshape(TB, Sq, D).astype(jnp.bfloat16)
    kp = (kv_all[:, D:2 * D] + vec[1:2]).reshape(TB, Skv, D).astype(jnp.bfloat16)
    vp = (kv_all[:, 2 * D:3 * D] + vec[2:3]).reshape(TB, Skv, D).astype(jnp.bfloat16)

    # Additive kv padding mask (0 valid / -1e30 padded), built once per step.
    mask_add = ((mask_ref[0] - 1.0) * MASK_BIG)[:, None, :]        # (TB, 1, Skv)

    # Per-head loop kept (H=2): single-batch-dim 3D einsums lower robustly on
    # Mosaic; a 2-batch-dim formulation is only a modest win at H=2.
    heads = []
    for h in range(H):                                             # static unroll
        sl = slice(h * hd, (h + 1) * hd)
        s = jnp.einsum("bqd,bkd->bqk", qp[..., sl], kp[..., sl],
                       preferred_element_type=jnp.float32)
        s = s + mask_add
        s = s - jnp.max(s, axis=-1, keepdims=True)
        e = jnp.exp(s)
        denom = jnp.sum(e, axis=-1, keepdims=True)
        p_attn = e * pl.reciprocal(denom, approx=True)             # EUP slot
        heads.append(jnp.einsum("bqk,bkd->bqd", p_attn.astype(jnp.bfloat16),
                                vp[..., sl], preferred_element_type=jnp.float32))
    a = jnp.concatenate(heads, axis=-1).reshape(RQ, D)             # (RQ, D) f32

    # Post-attention LayerNorm (over D), single-pass statistics.
    mu = jnp.mean(a, axis=-1, keepdims=True)
    ex2 = jnp.mean(a * a, axis=-1, keepdims=True)
    var = jnp.maximum(ex2 - mu * mu, 0.0)
    an = (a - mu) * jax.lax.rsqrt(var + EPS) * vec[4:5] + vec[5:6]

    out = jnp.dot(an.astype(jnp.bfloat16), w_bf[:, 3 * D:4 * D],
                  preferred_element_type=jnp.float32) + vec[3:4]   # (RQ, D)

    if o_ref.ndim == 3:
        # Lane-dense store: fold Sq rows into lanes -> unmasked 128-wide vst.
        o_ref[...] = out.reshape(1, TB, Sq * D)
    else:
        o_ref[...] = out


def _device_policy():
    """(per-step live-VMEM budget, min grid steps, vmem_limit cap) per chip."""
    try:
        kind = jax.devices()[0].device_kind.lower()
    except Exception:
        kind = ""
    if "7" in kind:                         # v7x: 2 TensorCores, 64 MiB VMEM/TC
        return 16 << 20, 2, 48 << 20
    return 40 << 20, 1, 96 << 20            # v5e / v6e: 1 TensorCore, 128 MiB VMEM


def _vmem_estimate_bytes(tb, sq, skv, d):
    """Rough upper bound on live VMEM for one grid step."""
    f32 = 4
    lane = 128
    rq, rk = tb * sq, tb * skv
    io = 2 * f32 * (rq * d + rk * d + tb * max(skv, lane) + rq * d)   # dbl-buffered in/out
    wts = 2 * f32 * (d * 4 * d + 8 * lane)                            # weight / vec slabs
    proj = f32 * (rq + rk) * 4 * d                                    # q_all, kv_all
    acts = 3 * f32 * (rq * d + rk * d)                                # qp/kp/vp (+ bf16 copies)
    attn = 3 * f32 * tb * sq * max(skv, lane)                         # scores / exp / probs
    post = 4 * f32 * rq * d                                           # heads, a, an, out
    return io + wts + proj + acts + attn + post


def _pick_block_batch(batch, sq, skv, d):
    """Largest divisor of `batch` whose per-step VMEM estimate fits the device
    budget; keeps >= 2 grid steps only on v7x (dual TensorCores); caps rows/step."""
    budget, min_steps, _ = _device_policy()
    min_steps = min(min_steps, batch)
    best = 1
    for tb in range(1, batch + 1):
        if batch % tb:
            continue
        if batch // tb < min_steps:
            continue
        if tb * max(sq, skv) > 8192:            # rows-per-step upper target
            continue
        if _vmem_estimate_bytes(tb, sq, skv, d) <= budget:
            best = tb
    return best


def multi_headed_attention_block(q_seq, kv_seq, kv_mask, params, block_batch=None):
    """q_seq: (B, Sq, D)  kv_seq: (B, Skv, D)  kv_mask: (B, Skv) bool."""
    B, Sq, D = q_seq.shape
    Skv = kv_seq.shape[1]

    # Pad sequence lengths to multiples of 8 so in-kernel reshapes are views.
    Sq_p = _round_up(Sq, 8)
    Skv_p = _round_up(Skv, 8)
    if Sq_p != Sq:
        q_seq = jnp.pad(q_seq, ((0, 0), (0, Sq_p - Sq), (0, 0)))
    if Skv_p != Skv:
        kv_seq = jnp.pad(kv_seq, ((0, 0), (0, Skv_p - Skv), (0, 0)))
        kv_mask = jnp.pad(kv_mask, ((0, 0), (0, Skv_p - Skv)))       # pads False

    tb = block_batch if block_batch is not None else _pick_block_batch(B, Sq_p, Skv_p, D)
    assert B % tb == 0, "block_batch must divide batch"
    n_steps = B // tb

    q2d = q_seq.reshape(B * Sq_p, D)
    kv2d = kv_seq.reshape(B * Skv_p, D)
    mask3d = kv_mask.astype(jnp.float32).reshape(n_steps, tb, Skv_p)

    p = params
    w_slab = jnp.concatenate([p["wq"], p["wk"], p["wv"], p["wo"]], axis=1)   # (D, 4D)
    vec_slab = jnp.concatenate(
        [p["bq"], p["bk"], p["bv"], p["bo"], p["lng"], p["lnb"]], axis=0)    # (6, D)

    est = _vmem_estimate_bytes(tb, Sq_p, Skv_p, D)
    _, _, vmem_cap = _device_policy()
    vmem_limit = int(min(max(2 * est + (4 << 20), 32 << 20), vmem_cap))

    in_specs = [
        pl.BlockSpec((tb * Sq_p, D), lambda i: (i, 0)),
        pl.BlockSpec((tb * Skv_p, D), lambda i: (i, 0)),
        pl.BlockSpec((1, tb, Skv_p), lambda i: (i, 0, 0)),
        pl.BlockSpec((D, 4 * D), lambda i: (0, 0)),
        pl.BlockSpec((6, D), lambda i: (0, 0)),
    ]

    def run(lane_dense):
        if lane_dense:
            out_shape = jax.ShapeDtypeStruct((n_steps, tb, Sq_p * D), jnp.float32)
            out_spec = pl.BlockSpec((1, tb, Sq_p * D), lambda i: (i, 0, 0))
        else:
            out_shape = jax.ShapeDtypeStruct((B * Sq_p, D), jnp.float32)
            out_spec = pl.BlockSpec((tb * Sq_p, D), lambda i: (i, 0))
        return pl.pallas_call(
            mha_block_kernel,
            out_shape=out_shape,
            grid_spec=pltpu.PrefetchScalarGridSpec(
                num_scalar_prefetch=0,
                grid=(n_steps,),
                in_specs=in_specs,
                out_specs=out_spec,
            ),
            compiler_params=pltpu.CompilerParams(
                dimension_semantics=("parallel",),
                vmem_limit_bytes=vmem_limit,
            ),
        )(q2d, kv2d, mask3d, w_slab, vec_slab)

    try:
        out = jax.block_until_ready(run(lane_dense=True))
    except Exception:
        # TODO(synk): lane-dense fold reshape unsupported on this Mosaic build;
        # fall back to the (rows, D) output layout.
        out = run(lane_dense=False)

    out = out.reshape(B, Sq_p, D)
    if Sq_p != Sq:
        out = out[:, :Sq]
    return out


# ----------------------- pure-JAX reference (for checking) -----------------------
def reference(q_seq, kv_seq, kv_mask, p):
    def ln(x, g, b):
        mu = x.mean(-1, keepdims=True)
        var = ((x - mu) ** 2).mean(-1, keepdims=True)
        return (x - mu) / jnp.sqrt(var + EPS) * g + b

    B, Sq, D = q_seq.shape
    Skv = kv_seq.shape[1]
    qp = q_seq @ p["wq"] + p["bq"]
    kp = kv_seq @ p["wk"] + p["bk"]
    vp = kv_seq @ p["wv"] + p["bv"]
    qh = qp.reshape(B, Sq, NUM_HEADS, HEAD_DIM).transpose(0, 2, 1, 3)
    kh = kp.reshape(B, Skv, NUM_HEADS, HEAD_DIM).transpose(0, 2, 1, 3)
    vh = vp.reshape(B, Skv, NUM_HEADS, HEAD_DIM).transpose(0, 2, 1, 3)
    scores = jnp.einsum("bhqd,bhkd->bhqk", qh, kh) / (HEAD_DIM ** 0.5)
    scores = jnp.where(kv_mask[:, None, None, :], scores, NEG_INF)
    scores = scores - scores.max(-1, keepdims=True)
    w = jnp.exp(scores)
    w = w / w.sum(-1, keepdims=True)
    a = jnp.einsum("bhqk,bhkd->bhqd", w, vh).transpose(0, 2, 1, 3).reshape(B, Sq, D)
    a = ln(a, p["lng"], p["lnb"])
    return a @ p["wo"] + p["bo"]


def make_params(key):
    ks = jax.random.split(key, 10)
    D = MODEL_DIM
    normal = lambda k, s: jax.random.normal(k, s, jnp.float32) * 0.1
    return {
        "wq": normal(ks[0], (D, D)), "bq": normal(ks[1], (1, D)),
        "wk": normal(ks[2], (D, D)), "bk": normal(ks[3], (1, D)),
        "wv": normal(ks[4], (D, D)), "bv": normal(ks[5], (1, D)),
        "wo": normal(ks[6], (D, D)), "bo": normal(ks[7], (1, D)),
        "lng": 1.0 + normal(ks[8], (1, D)),
        "lnb": normal(ks[9], (1, D)),
    }


if __name__ == "__main__":
    key = jax.random.PRNGKey(0)
    k_q, k_kv, k_m, k_p = jax.random.split(key, 4)

    B, Sq, Skv, D = 4, 8, 16, MODEL_DIM
    q_seq = jax.random.normal(k_q, (B, Sq, D), jnp.float32)
    kv_seq = jax.random.normal(k_kv, (B, Skv, D), jnp.float32)
    kv_mask = jax.random.bernoulli(k_m, 0.7, (B, Skv))
    kv_mask = kv_mask.at[:, 0].set(True)  # keep >=1 valid key per batch

    params = make_params(k_p)

    out = multi_headed_attention_block(q_seq, kv_seq, kv_mask, params)
    out = jax.block_until_ready(out)

    ref = jax.block_until_ready(reference(q_seq, kv_seq, kv_mask, params))
    # Tolerance reflects bf16 MXU operands (fp32 accumulation) + approx reciprocal.
    np.testing.assert_allclose(np.asarray(out), np.asarray(ref), rtol=3e-2, atol=3e-2)

    print("KERNEL_OK")
</pallas_src>

<mosaic_0001>
module attributes {stable_mosaic.version = 11 : i64} {
  func.func @mha_block_kernel(%arg0: i32, %arg1: memref<32x32xf32, #tpu.memory_space<vmem>>, %arg2: memref<64x32xf32, #tpu.memory_space<vmem>>, %arg3: memref<1x4x16xf32, #tpu.memory_space<vmem>>, %arg4: memref<32x128xf32, #tpu.memory_space<vmem>>, %arg5: memref<6x32xf32, #tpu.memory_space<vmem>>, %arg6: memref<1x4x256xf32, #tpu.memory_space<vmem>>) attributes {dimension_semantics = [#tpu.dimension_semantics<parallel>], iteration_bounds = array<i64: 1>, scalar_prefetch = 0 : i64, scratch_operands = 0 : i64, tpu.core_type = #tpu.core_type<tc>, window_params = [{transform_indices = @transform_0, window_bounds = array<i64: 32, 32>}, {transform_indices = @transform_1, window_bounds = array<i64: 64, 32>}, {transform_indices = @transform_2, window_bounds = array<i64: 1, 4, 16>}, {pipeline_mode = #tpu.pipeline_mode<synchronous>, transform_indices = @transform_3, window_bounds = array<i64: 32, 128>}, {pipeline_mode = #tpu.pipeline_mode<synchronous>, transform_indices = @transform_4, window_bounds = array<i64: 6, 32>}, {transform_indices = @transform_5, window_bounds = array<i64: 1, 4, 256>}]} {
    %c0 = arith.constant 0 : index
    %c0_0 = arith.constant 0 : index
    %0 = vector.load %arg4[%c0, %c0_0] : memref<32x128xf32, #tpu.memory_space<vmem>>, vector<32x128xf32>
    %1 = arith.truncf %0 : vector<32x128xf32> to vector<32x128xbf16>
    %c0_1 = arith.constant 0 : index
    %c0_2 = arith.constant 0 : index
    %2 = vector.load %arg5[%c0_1, %c0_2] : memref<6x32xf32, #tpu.memory_space<vmem>>, vector<6x32xf32>
    %c0_3 = arith.constant 0 : index
    %c0_4 = arith.constant 0 : index
    %3 = vector.load %arg1[%c0_3, %c0_4] : memref<32x32xf32, #tpu.memory_space<vmem>>, vector<32x32xf32>
    %4 = arith.truncf %3 : vector<32x32xf32> to vector<32x32xbf16>
    %cst = arith.constant dense<0.000000e+00> : vector<32x128xf32>
    %5 = tpu.matmul %4, %1, %cst {dimension_numbers = #tpu.dot_dimension_numbers<[1], [0], [0], [1], [0, 0, 1, 1], [], []>} : vector<32x32xbf16>, vector<32x128xbf16>, vector<32x128xf32> -> vector<32x128xf32>
    %c0_5 = arith.constant 0 : index
    %c0_6 = arith.constant 0 : index
    %6 = vector.load %arg2[%c0_5, %c0_6] : memref<64x32xf32, #tpu.memory_space<vmem>>, vector<64x32xf32>
    %7 = arith.truncf %6 : vector<64x32xf32> to vector<64x32xbf16>
    %cst_7 = arith.constant dense<0.000000e+00> : vector<64x128xf32>
    %8 = tpu.matmul %7, %1, %cst_7 {dimension_numbers = #tpu.dot_dimension_numbers<[1], [0], [0], [1], [0, 0, 1, 1], [], []>} : vector<64x32xbf16>, vector<32x128xbf16>, vector<64x128xf32> -> vector<64x128xf32>
    %9 = vector.extract_strided_slice %5 {offsets = [0, 0], sizes = [32, 32], strides = [1, 1]} : vector<32x128xf32> to vector<32x32xf32>
    %10 = vector.extract_strided_slice %2 {offsets = [0, 0], sizes = [1, 32], strides = [1, 1]} : vector<6x32xf32> to vector<1x32xf32>
    %11 = vector.broadcast %10 : vector<1x32xf32> to vector<32x32xf32>
    %12 = arith.addf %9, %11 : vector<32x32xf32>
    %cst_8 = arith.constant 2.500000e-01 : f32
    %13 = vector.broadcast %cst_8 : f32 to vector<32x32xf32>
    %14 = arith.mulf %12, %13 : vector<32x32xf32>
    %15 = vector.shape_cast %14 : vector<32x32xf32> to vector<4x8x32xf32>
    %16 = arith.truncf %15 : vector<4x8x32xf32> to vector<4x8x32xbf16>
    %17 = vector.extract_strided_slice %8 {offsets = [0, 32], sizes = [64, 32], strides = [1, 1]} : vector<64x128xf32> to vector<64x32xf32>
    %18 = vector.extract_strided_slice %2 {offsets = [1, 0], sizes = [1, 32], strides = [1, 1]} : vector<6x32xf32> to vector<1x32xf32>
    %19 = vector.broadcast %18 : vector<1x32xf32> to vector<64x32xf32>
    %20 = arith.addf %17, %19 : vector<64x32xf32>
    %21 = vector.shape_cast %20 : vector<64x32xf32> to vector<4x16x32xf32>
    %22 = arith.truncf %21 : vector<4x16x32xf32> to vector<4x16x32xbf16>
    %23 = vector.extract_strided_slice %8 {offsets = [0, 64], sizes = [64, 32], strides = [1, 1]} : vector<64x128xf32> to vector<64x32xf32>
    %24 = vector.extract_strided_slice %2 {offsets = [2, 0], sizes = [1, 32], strides = [1, 1]} : vector<6x32xf32> to vector<1x32xf32>
    %25 = vector.broadcast %24 : vector<1x32xf32> to vector<64x32xf32>
    %26 = arith.addf %23, %25 : vector<64x32xf32>
    %27 = vector.shape_cast %26 : vector<64x32xf32> to vector<4x16x32xf32>
    %28 = arith.truncf %27 : vector<4x16x32xf32> to vector<4x16x32xbf16>
    %c0_9 = arith.constant 0 : index
    %c0_10 = arith.constant 0 : index
    %c0_11 = arith.constant 0 : index
    %29 = vector.load %arg3[%c0_9, %c0_10, %c0_11] : memref<1x4x16xf32, #tpu.memory_space<vmem>>, vector<1x4x16xf32>
    %30 = vector.shape_cast %29 : vector<1x4x16xf32> to vector<4x16xf32>
    %cst_12 = arith.constant 1.000000e+00 : f32
    %31 = vector.broadcast %cst_12 : f32 to vector<4x16xf32>
    %32 = arith.subf %30, %31 : vector<4x16xf32>
    %cst_13 = arith.constant 1.000000e+30 : f32
    %33 = vector.broadcast %cst_13 : f32 to vector<4x16xf32>
    %34 = arith.mulf %32, %33 : vector<4x16xf32>
    %35 = vector.shape_cast %34 : vector<4x16xf32> to vector<4x1x16xf32>
    %36 = vector.extract_strided_slice %16 {offsets = [0, 0, 0], sizes = [4, 8, 16], strides = [1, 1, 1]} : vector<4x8x32xbf16> to vector<4x8x16xbf16>
    %37 = vector.extract_strided_slice %22 {offsets = [0, 0, 0], sizes = [4, 16, 16], strides = [1, 1, 1]} : vector<4x16x32xbf16> to vector<4x16x16xbf16>
    "tpu.trace_start"() <{level = 10 : i32, message = "bqd,bkd->bqk"}> : () -> ()
    %cst_14 = arith.constant dense<0.000000e+00> : vector<4x8x16xf32>
    %38 = tpu.matmul %36, %37, %cst_14 {dimension_numbers = #tpu.dot_dimension_numbers<[2], [2], [1], [1], [0, 0, 0, 1, 1, 1], [0], [0]>} : vector<4x8x16xbf16>, vector<4x16x16xbf16>, vector<4x8x16xf32> -> vector<4x8x16xf32>
    "tpu.trace_stop"() : () -> ()
    %39 = vector.broadcast %35 : vector<4x1x16xf32> to vector<4x8x16xf32>
    %40 = arith.addf %38, %39 : vector<4x8x16xf32>
    %cst_15 = arith.constant dense<0xFF800000> : vector<4x8xf32>
    %41 = vector.multi_reduction <maximumf>, %40, %cst_15 [2] : vector<4x8x16xf32> to vector<4x8xf32>
    %42 = vector.shape_cast %41 : vector<4x8xf32> to vector<4x8x1xf32>
    %43 = vector.broadcast %42 : vector<4x8x1xf32> to vector<4x8x16xf32>
    %44 = arith.subf %40, %43 : vector<4x8x16xf32>
    %45 = math.exp %44 : vector<4x8x16xf32>
    %cst_16 = arith.constant dense<0.000000e+00> : vector<4x8xf32>
    %46 = vector.multi_reduction <add>, %45, %cst_16 [2] : vector<4x8x16xf32> to vector<4x8xf32>
    %47 = vector.shape_cast %46 : vector<4x8xf32> to vector<4x8x1xf32>
    %48 = tpu.reciprocal %47 {approx = true} : vector<4x8x1xf32> -> vector<4x8x1xf32>
    %49 = vector.broadcast %48 : vector<4x8x1xf32> to vector<4x8x16xf32>
    %50 = arith.mulf %45, %49 : vector<4x8x16xf32>
    %51 = arith.truncf %50 : vector<4x8x16xf32> to vector<4x8x16xbf16>
    %52 = vector.extract_strided_slice %28 {offsets = [0, 0, 0], sizes = [4, 16, 16], strides = [1, 1, 1]} : vector<4x16x32xbf16> to vector<4x16x16xbf16>
    "tpu.trace_start"() <{level = 10 : i32, message = "bqk,bkd->bqd"}> : () -> ()
    %cst_17 = arith.constant dense<0.000000e+00> : vector<4x8x16xf32>
    %53 = tpu.matmul %51, %52, %cst_17 {dimension_numbers = #tpu.dot_dimension_numbers<[2], [1], [1], [2], [0, 0, 0, 1, 1, 2], [0], [0]>} : vector<4x8x16xbf16>, vector<4x16x16xbf16>, vector<4x8x16xf32> -> vector<4x8x16xf32>
    "tpu.trace_stop"() : () -> ()
    %54 = vector.extract_strided_slice %16 {offsets = [0, 0, 16], sizes = [4, 8, 16], strides = [1, 1, 1]} : vector<4x8x32xbf16> to vector<4x8x16xbf16>
    %55 = vector.extract_strided_slice %22 {offsets = [0, 0, 16], sizes = [4, 16, 16], strides = [1, 1, 1]} : vector<4x16x32xbf16> to vector<4x16x16xbf16>
    "tpu.trace_start"() <{level = 10 : i32, message = "bqd,bkd->bqk"}> : () -> ()
    %cst_18 = arith.constant dense<0.000000e+00> : vector<4x8x16xf32>
    %56 = tpu.matmul %54, %55, %cst_18 {dimension_numbers = #tpu.dot_dimension_numbers<[2], [2], [1], [1], [0, 0, 0, 1, 1, 1], [0], [0]>} : vector<4x8x16xbf16>, vector<4x16x16xbf16>, vector<4x8x16xf32> -> vector<4x8x16xf32>
    "tpu.trace_stop"() : () -> ()
    %57 = vector.broadcast %35 : vector<4x1x16xf32> to vector<4x8x16xf32>
    %58 = arith.addf %56, %57 : vector<4x8x16xf32>
    %cst_19 = arith.constant dense<0xFF800000> : vector<4x8xf32>
    %59 = vector.multi_reduction <maximumf>, %58, %cst_19 [2] : vector<4x8x16xf32> to vector<4x8xf32>
    %60 = vector.shape_cast %59 : vector<4x8xf32> to vector<4x8x1xf32>
    %61 = vector.broadcast %60 : vector<4x8x1xf32> to vector<4x8x16xf32>
    %62 = arith.subf %58, %61 : vector<4x8x16xf32>
    %63 = math.exp %62 : vector<4x8x16xf32>
    %cst_20 = arith.constant dense<0.000000e+00> : vector<4x8xf32>
    %64 = vector.multi_reduction <add>, %63, %cst_20 [2] : vector<4x8x16xf32> to vector<4x8xf32>
    %65 = vector.shape_cast %64 : vector<4x8xf32> to vector<4x8x1xf32>
    %66 = tpu.reciprocal %65 {approx = true} : vector<4x8x1xf32> -> vector<4x8x1xf32>
    %67 = vector.broadcast %66 : vector<4x8x1xf32> to vector<4x8x16xf32>
    %68 = arith.mulf %63, %67 : vector<4x8x16xf32>
    %69 = arith.truncf %68 : vector<4x8x16xf32> to vector<4x8x16xbf16>
    %70 = vector.extract_strided_slice %28 {offsets = [0, 0, 16], sizes = [4, 16, 16], strides = [1, 1, 1]} : vector<4x16x32xbf16> to vector<4x16x16xbf16>
    "tpu.trace_start"() <{level = 10 : i32, message = "bqk,bkd->bqd"}> : () -> ()
    %cst_21 = arith.constant dense<0.000000e+00> : vector<4x8x16xf32>
    %71 = tpu.matmul %69, %70, %cst_21 {dimension_numbers = #tpu.dot_dimension_numbers<[2], [1], [1], [2], [0, 0, 0, 1, 1, 2], [0], [0]>} : vector<4x8x16xbf16>, vector<4x16x16xbf16>, vector<4x8x16xf32> -> vector<4x8x16xf32>
    "tpu.trace_stop"() : () -> ()
    %72 = tpu.concatenate %53, %71 in 2 : vector<4x8x16xf32>, vector<4x8x16xf32> -> vector<4x8x32xf32>
    %73 = vector.shape_cast %72 : vector<4x8x32xf32> to vector<32x32xf32>
    %cst_22 = arith.constant dense<0.000000e+00> : vector<32xf32>
    %74 = vector.multi_reduction <add>, %73, %cst_22 [1] : vector<32x32xf32> to vector<32xf32>
    %75 = vector.shape_cast %74 : vector<32xf32> to vector<32x1xf32>
    %cst_23 = arith.constant 3.200000e+01 : f32
    %76 = vector.broadcast %cst_23 : f32 to vector<32x1xf32>
    %77 = arith.divf %75, %76 : vector<32x1xf32>
    %78 = arith.mulf %73, %73 : vector<32x32xf32>
    %cst_24 = arith.constant dense<0.000000e+00> : vector<32xf32>
    %79 = vector.multi_reduction <add>, %78, %cst_24 [1] : vector<32x32xf32> to vector<32xf32>
    %80 = vector.shape_cast %79 : vector<32xf32> to vector<32x1xf32>
    %cst_25 = arith.constant 3.200000e+01 : f32
    %81 = vector.broadcast %cst_25 : f32 to vector<32x1xf32>
    %82 = arith.divf %80, %81 : vector<32x1xf32>
    %83 = arith.mulf %77, %77 : vector<32x1xf32>
    %84 = arith.subf %82, %83 : vector<32x1xf32>
    %cst_26 = arith.constant 0.000000e+00 : f32
    %85 = vector.broadcast %cst_26 : f32 to vector<32x1xf32>
    %86 = arith.maximumf %84, %85 : vector<32x1xf32>
    %87 = vector.broadcast %77 : vector<32x1xf32> to vector<32x32xf32>
    %88 = arith.subf %73, %87 : vector<32x32xf32>
    %cst_27 = arith.constant 9.99999974E-6 : f32
    %89 = vector.broadcast %cst_27 : f32 to vector<32x1xf32>
    %90 = arith.addf %86, %89 : vector<32x1xf32>
    %91 = math.rsqrt %90 : vector<32x1xf32>
    %92 = vector.broadcast %91 : vector<32x1xf32> to vector<32x32xf32>
    %93 = arith.mulf %88, %92 : vector<32x32xf32>
    %94 = vector.extract_strided_slice %2 {offsets = [4, 0], sizes = [1, 32], strides = [1, 1]} : vector<6x32xf32> to vector<1x32xf32>
    %95 = vector.broadcast %94 : vector<1x32xf32> to vector<32x32xf32>
    %96 = arith.mulf %93, %95 : vector<32x32xf32>
    %97 = vector.extract_strided_slice %2 {offsets = [5, 0], sizes = [1, 32], strides = [1, 1]} : vector<6x32xf32> to vector<1x32xf32>
    %98 = vector.broadcast %97 : vector<1x32xf32> to vector<32x32xf32>
    %99 = arith.addf %96, %98 : vector<32x32xf32>
    %100 = arith.truncf %99 : vector<32x32xf32> to vector<32x32xbf16>
    %101 = vector.extract_strided_slice %1 {offsets = [0, 96], sizes = [32, 32], strides = [1, 1]} : vector<32x128xbf16> to vector<32x32xbf16>
    %cst_28 = arith.constant dense<0.000000e+00> : vector<32x32xf32>
    %102 = tpu.matmul %100, %101, %cst_28 {dimension_numbers = #tpu.dot_dimension_numbers<[1], [0], [0], [1], [0, 0, 1, 1], [], []>} : vector<32x32xbf16>, vector<32x32xbf16>, vector<32x32xf32> -> vector<32x32xf32>
    %103 = vector.extract_strided_slice %2 {offsets = [3, 0], sizes = [1, 32], strides = [1, 1]} : vector<6x32xf32> to vector<1x32xf32>
    %104 = vector.broadcast %103 : vector<1x32xf32> to vector<32x32xf32>
    %105 = arith.addf %102, %104 : vector<32x32xf32>
    %106 = vector.shape_cast %105 : vector<32x32xf32> to vector<1x4x256xf32>
    %c0_29 = arith.constant 0 : index
    %c0_30 = arith.constant 0 : index
    %c0_31 = arith.constant 0 : index
    %107 = vector.load %arg6[%c0_29, %c0_30, %c0_31] : memref<1x4x256xf32, #tpu.memory_space<vmem>>, vector<1x4x256xf32>
    tpu.vector_store %arg6[%c0_29, %c0_30, %c0_31], %106 {strides = array<i32>} : memref<1x4x256xf32, #tpu.memory_space<vmem>>, vector<1x4x256xf32>,
    return
  }
  func.func @transform_0(%arg0: i32) -> (i32, i32) {
    %c0_i32 = arith.constant 0 : i32
    %c0_i32_0 = arith.constant 0 : i32
    return %arg0, %c0_i32 : i32, i32
  }
  func.func @transform_1(%arg0: i32) -> (i32, i32) {
    %c0_i32 = arith.constant 0 : i32
    %c0_i32_0 = arith.constant 0 : i32
    return %arg0, %c0_i32 : i32, i32
  }
  func.func @transform_2(%arg0: i32) -> (i32, i32, i32) {
    %c0_i32 = arith.constant 0 : i32
    %c0_i32_0 = arith.constant 0 : i32
    %c0_i32_1 = arith.constant 0 : i32
    return %arg0, %c0_i32, %c0_i32_0 : i32, i32, i32
  }
  func.func @transform_3(%arg0: i32) -> (i32, i32) {
    %c0_i32 = arith.constant 0 : i32
    %c0_i32_0 = arith.constant 0 : i32
    %c0_i32_1 = arith.constant 0 : i32
    return %c0_i32, %c0_i32_0 : i32, i32
  }
  func.func @transform_4(%arg0: i32) -> (i32, i32) {
    %c0_i32 = arith.constant 0 : i32
    %c0_i32_0 = arith.constant 0 : i32
    %c0_i32_1 = arith.constant 0 : i32
    return %c0_i32, %c0_i32_0 : i32, i32
  }
  func.func @transform_5(%arg0: i32) -> (i32, i32, i32) {
    %c0_i32 = arith.constant 0 : i32
    %c0_i32_0 = arith.constant 0 : i32
    %c0_i32_1 = arith.constant 0 : i32
    return %arg0, %c0_i32, %c0_i32_0 : i32, i32, i32
  }
}

module attributes {stable_mosaic.version = 11 : i64} {
  func.func @mha_block_kernel(%arg0: i32, %arg1: memref<32x32xf32, #tpu.memory_space<vmem>>, %arg2: memref<64x32xf32, #tpu.memory_space<vmem>>, %arg3: memref<1x4x16xf32, #tpu.memory_space<vmem>>, %arg4: memref<32x128xf32, #tpu.memory_space<vmem>>, %arg5: memref<6x32xf32, #tpu.memory_space<vmem>>, %arg6: memref<32x32xf32, #tpu.memory_space<vmem>>) attributes {dimension_semantics = [#tpu.dimension_semantics<parallel>], iteration_bounds = array<i64: 1>, scalar_prefetch = 0 : i64, scratch_operands = 0 : i64, tpu.core_type = #tpu.core_type<tc>, window_params = [{transform_indices = @transform_0, window_bounds = array<i64: 32, 32>}, {transform_indices = @transform_1, window_bounds = array<i64: 64, 32>}, {transform_indices = @transform_2, window_bounds = array<i64: 1, 4, 16>}, {pipeline_mode = #tpu.pipeline_mode<synchronous>, transform_indices = @transform_3, window_bounds = array<i64: 32, 128>}, {pipeline_mode = #tpu.pipeline_mode<synchronous>, transform_indices = @transform_4, window_bounds = array<i64: 6, 32>}, {transform_indices = @transform_5, window_bounds = array<i64: 32, 32>}]} {
    %c0 = arith.constant 0 : index
    %c0_0 = arith.constant 0 : index
    %0 = vector.load %arg4[%c0, %c0_0] : memref<32x128xf32, #tpu.memory_space<vmem>>, vector<32x128xf32>
    %1 = arith.truncf %0 : vector<32x128xf32> to vector<32x128xbf16>
    %c0_1 = arith.constant 0 : index
    %c0_2 = arith.constant 0 : index
    %2 = vector.load %arg5[%c0_1, %c0_2] : memref<6x32xf32, #tpu.memory_space<vmem>>, vector<6x32xf32>
    %c0_3 = arith.constant 0 : index
    %c0_4 = arith.constant 0 : index
    %3 = vector.load %arg1[%c0_3, %c0_4] : memref<32x32xf32, #tpu.memory_space<vmem>>, vector<32x32xf32>
    %4 = arith.truncf %3 : vector<32x32xf32> to vector<32x32xbf16>
    %cst = arith.constant dense<0.000000e+00> : vector<32x128xf32>
    %5 = tpu.matmul %4, %1, %cst {dimension_numbers = #tpu.dot_dimension_numbers<[1], [0], [0], [1], [0, 0, 1, 1], [], []>} : vector<32x32xbf16>, vector<32x128xbf16>, vector<32x128xf32> -> vector<32x128xf32>
    %c0_5 = arith.constant 0 : index
    %c0_6 = arith.constant 0 : index
    %6 = vector.load %arg2[%c0_5, %c0_6] : memref<64x32xf32, #tpu.memory_space<vmem>>, vector<64x32xf32>
    %7 = arith.truncf %6 : vector<64x32xf32> to vector<64x32xbf16>
    %cst_7 = arith.constant dense<0.000000e+00> : vector<64x128xf32>
    %8 = tpu.matmul %7, %1, %cst_7 {dimension_numbers = #tpu.dot_dimension_numbers<[1], [0], [0], [1], [0, 0, 1, 1], [], []>} : vector<64x32xbf16>, vector<32x128xbf16>, vector<64x128xf32> -> vector<64x128xf32>
    %9 = vector.extract_strided_slice %5 {offsets = [0, 0], sizes = [32, 32], strides = [1, 1]} : vector<32x128xf32> to vector<32x32xf32>
    %10 = vector.extract_strided_slice %2 {offsets = [0, 0], sizes = [1, 32], strides = [1, 1]} : vector<6x32xf32> to vector<1x32xf32>
    %11 = vector.broadcast %10 : vector<1x32xf32> to vector<32x32xf32>
    %12 = arith.addf %9, %11 : vector<32x32xf32>
    %cst_8 = arith.constant 2.500000e-01 : f32
    %13 = vector.broadcast %cst_8 : f32 to vector<32x32xf32>
    %14 = arith.mulf %12, %13 : vector<32x32xf32>
    %15 = vector.shape_cast %14 : vector<32x32xf32> to vector<4x8x32xf32>
    %16 = arith.truncf %15 : vector<4x8x32xf32> to vector<4x8x32xbf16>
    %17 = vector.extract_strided_slice %8 {offsets = [0, 32], sizes = [64, 32], strides = [1, 1]} : vector<64x128xf32> to vector<64x32xf32>
    %18 = vector.extract_strided_slice %2 {offsets = [1, 0], sizes = [1, 32], strides = [1, 1]} : vector<6x32xf32> to vector<1x32xf32>
    %19 = vector.broadcast %18 : vector<1x32xf32> to vector<64x32xf32>
    %20 = arith.addf %17, %19 : vector<64x32xf32>
    %21 = vector.shape_cast %20 : vector<64x32xf32> to vector<4x16x32xf32>
    %22 = arith.truncf %21 : vector<4x16x32xf32> to vector<4x16x32xbf16>
    %23 = vector.extract_strided_slice %8 {offsets = [0, 64], sizes = [64, 32], strides = [1, 1]} : vector<64x128xf32> to vector<64x32xf32>
    %24 = vector.extract_strided_slice %2 {offsets = [2, 0], sizes = [1, 32], strides = [1, 1]} : vector<6x32xf32> to vector<1x32xf32>
    %25 = vector.broadcast %24 : vector<1x32xf32> to vector<64x32xf32>
    %26 = arith.addf %23, %25 : vector<64x32xf32>
    %27 = vector.shape_cast %26 : vector<64x32xf32> to vector<4x16x32xf32>
    %28 = arith.truncf %27 : vector<4x16x32xf32> to vector<4x16x32xbf16>
    %c0_9 = arith.constant 0 : index
    %c0_10 = arith.constant 0 : index
    %c0_11 = arith.constant 0 : index
    %29 = vector.load %arg3[%c0_9, %c0_10, %c0_11] : memref<1x4x16xf32, #tpu.memory_space<vmem>>, vector<1x4x16xf32>
    %30 = vector.shape_cast %29 : vector<1x4x16xf32> to vector<4x16xf32>
    %cst_12 = arith.constant 1.000000e+00 : f32
    %31 = vector.broadcast %cst_12 : f32 to vector<4x16xf32>
    %32 = arith.subf %30, %31 : vector<4x16xf32>
    %cst_13 = arith.constant 1.000000e+30 : f32
    %33 = vector.broadcast %cst_13 : f32 to vector<4x16xf32>
    %34 = arith.mulf %32, %33 : vector<4x16xf32>
    %35 = vector.shape_cast %34 : vector<4x16xf32> to vector<4x1x16xf32>
    %36 = vector.extract_strided_slice %16 {offsets = [0, 0, 0], sizes = [4, 8, 16], strides = [1, 1, 1]} : vector<4x8x32xbf16> to vector<4x8x16xbf16>
    %37 = vector.extract_strided_slice %22 {offsets = [0, 0, 0], sizes = [4, 16, 16], strides = [1, 1, 1]} : vector<4x16x32xbf16> to vector<4x16x16xbf16>
    "tpu.trace_start"() <{level = 10 : i32, message = "bqd,bkd->bqk"}> : () -> ()
    %cst_14 = arith.constant dense<0.000000e+00> : vector<4x8x16xf32>
    %38 = tpu.matmul %36, %37, %cst_14 {dimension_numbers = #tpu.dot_dimension_numbers<[2], [2], [1], [1], [0, 0, 0, 1, 1, 1], [0], [0]>} : vector<4x8x16xbf16>, vector<4x16x16xbf16>, vector<4x8x16xf32> -> vector<4x8x16xf32>
    "tpu.trace_stop"() : () -> ()
    %39 = vector.broadcast %35 : vector<4x1x16xf32> to vector<4x8x16xf32>
    %40 = arith.addf %38, %39 : vector<4x8x16xf32>
    %cst_15 = arith.constant dense<0xFF800000> : vector<4x8xf32>
    %41 = vector.multi_reduction <maximumf>, %40, %cst_15 [2] : vector<4x8x16xf32> to vector<4x8xf32>
    %42 = vector.shape_cast %41 : vector<4x8xf32> to vector<4x8x1xf32>
    %43 = vector.broadcast %42 : vector<4x8x1xf32> to vector<4x8x16xf32>
    %44 = arith.subf %40, %43 : vector<4x8x16xf32>
    %45 = math.exp %44 : vector<4x8x16xf32>
    %cst_16 = arith.constant dense<0.000000e+00> : vector<4x8xf32>
    %46 = vector.multi_reduction <add>, %45, %cst_16 [2] : vector<4x8x16xf32> to vector<4x8xf32>
    %47 = vector.shape_cast %46 : vector<4x8xf32> to vector<4x8x1xf32>
    %48 = tpu.reciprocal %47 {approx = true} : vector<4x8x1xf32> -> vector<4x8x1xf32>
    %49 = vector.broadcast %48 : vector<4x8x1xf32> to vector<4x8x16xf32>
    %50 = arith.mulf %45, %49 : vector<4x8x16xf32>
    %51 = arith.truncf %50 : vector<4x8x16xf32> to vector<4x8x16xbf16>
    %52 = vector.extract_strided_slice %28 {offsets = [0, 0, 0], sizes = [4, 16, 16], strides = [1, 1, 1]} : vector<4x16x32xbf16> to vector<4x16x16xbf16>
    "tpu.trace_start"() <{level = 10 : i32, message = "bqk,bkd->bqd"}> : () -> ()
    %cst_17 = arith.constant dense<0.000000e+00> : vector<4x8x16xf32>
    %53 = tpu.matmul %51, %52, %cst_17 {dimension_numbers = #tpu.dot_dimension_numbers<[2], [1], [1], [2], [0, 0, 0, 1, 1, 2], [0], [0]>} : vector<4x8x16xbf16>, vector<4x16x16xbf16>, vector<4x8x16xf32> -> vector<4x8x16xf32>
    "tpu.trace_stop"() : () -> ()
    %54 = vector.extract_strided_slice %16 {offsets = [0, 0, 16], sizes = [4, 8, 16], strides = [1, 1, 1]} : vector<4x8x32xbf16> to vector<4x8x16xbf16>
    %55 = vector.extract_strided_slice %22 {offsets = [0, 0, 16], sizes = [4, 16, 16], strides = [1, 1, 1]} : vector<4x16x32xbf16> to vector<4x16x16xbf16>
    "tpu.trace_start"() <{level = 10 : i32, message = "bqd,bkd->bqk"}> : () -> ()
    %cst_18 = arith.constant dense<0.000000e+00> : vector<4x8x16xf32>
    %56 = tpu.matmul %54, %55, %cst_18 {dimension_numbers = #tpu.dot_dimension_numbers<[2], [2], [1], [1], [0, 0, 0, 1, 1, 1], [0], [0]>} : vector<4x8x16xbf16>, vector<4x16x16xbf16>, vector<4x8x16xf32> -> vector<4x8x16xf32>
    "tpu.trace_stop"() : () -> ()
    %57 = vector.broadcast %35 : vector<4x1x16xf32> to vector<4x8x16xf32>
    %58 = arith.addf %56, %57 : vector<4x8x16xf32>
    %cst_19 = arith.constant dense<0xFF800000> : vector<4x8xf32>
    %59 = vector.multi_reduction <maximumf>, %58, %cst_19 [2] : vector<4x8x16xf32> to vector<4x8xf32>
    %60 = vector.shape_cast %59 : vector<4x8xf32> to vector<4x8x1xf32>
    %61 = vector.broadcast %60 : vector<4x8x1xf32> to vector<4x8x16xf32>
    %62 = arith.subf %58, %61 : vector<4x8x16xf32>
    %63 = math.exp %62 : vector<4x8x16xf32>
    %cst_20 = arith.constant dense<0.000000e+00> : vector<4x8xf32>
    %64 = vector.multi_reduction <add>, %63, %cst_20 [2] : vector<4x8x16xf32> to vector<4x8xf32>
    %65 = vector.shape_cast %64 : vector<4x8xf32> to vector<4x8x1xf32>
    %66 = tpu.reciprocal %65 {approx = true} : vector<4x8x1xf32> -> vector<4x8x1xf32>
    %67 = vector.broadcast %66 : vector<4x8x1xf32> to vector<4x8x16xf32>
    %68 = arith.mulf %63, %67 : vector<4x8x16xf32>
    %69 = arith.truncf %68 : vector<4x8x16xf32> to vector<4x8x16xbf16>
    %70 = vector.extract_strided_slice %28 {offsets = [0, 0, 16], sizes = [4, 16, 16], strides = [1, 1, 1]} : vector<4x16x32xbf16> to vector<4x16x16xbf16>
    "tpu.trace_start"() <{level = 10 : i32, message = "bqk,bkd->bqd"}> : () -> ()
    %cst_21 = arith.constant dense<0.000000e+00> : vector<4x8x16xf32>
    %71 = tpu.matmul %69, %70, %cst_21 {dimension_numbers = #tpu.dot_dimension_numbers<[2], [1], [1], [2], [0, 0, 0, 1, 1, 2], [0], [0]>} : vector<4x8x16xbf16>, vector<4x16x16xbf16>, vector<4x8x16xf32> -> vector<4x8x16xf32>
    "tpu.trace_stop"() : () -> ()
    %72 = tpu.concatenate %53, %71 in 2 : vector<4x8x16xf32>, vector<4x8x16xf32> -> vector<4x8x32xf32>
    %73 = vector.shape_cast %72 : vector<4x8x32xf32> to vector<32x32xf32>
    %cst_22 = arith.constant dense<0.000000e+00> : vector<32xf32>
    %74 = vector.multi_reduction <add>, %73, %cst_22 [1] : vector<32x32xf32> to vector<32xf32>
    %75 = vector.shape_cast %74 : vector<32xf32> to vector<32x1xf32>
    %cst_23 = arith.constant 3.200000e+01 : f32
    %76 = vector.broadcast %cst_23 : f32 to vector<32x1xf32>
    %77 = arith.divf %75, %76 : vector<32x1xf32>
    %78 = arith.mulf %73, %73 : vector<32x32xf32>
    %cst_24 = arith.constant dense<0.000000e+00> : vector<32xf32>
    %79 = vector.multi_reduction <add>, %78, %cst_24 [1] : vector<32x32xf32> to vector<32xf32>
    %80 = vector.shape_cast %79 : vector<32xf32> to vector<32x1xf32>
    %cst_25 = arith.constant 3.200000e+01 : f32
    %81 = vector.broadcast %cst_25 : f32 to vector<32x1xf32>
    %82 = arith.divf %80, %81 : vector<32x1xf32>
    %83 = arith.mulf %77, %77 : vector<32x1xf32>
    %84 = arith.subf %82, %83 : vector<32x1xf32>
    %cst_26 = arith.constant 0.000000e+00 : f32
    %85 = vector.broadcast %cst_26 : f32 to vector<32x1xf32>
    %86 = arith.maximumf %84, %85 : vector<32x1xf32>
    %87 = vector.broadcast %77 : vector<32x1xf32> to vector<32x32xf32>
    %88 = arith.subf %73, %87 : vector<32x32xf32>
    %cst_27 = arith.constant 9.99999974E-6 : f32
    %89 = vector.broadcast %cst_27 : f32 to vector<32x1xf32>
    %90 = arith.addf %86, %89 : vector<32x1xf32>
    %91 = math.rsqrt %90 : vector<32x1xf32>
    %92 = vector.broadcast %91 : vector<32x1xf32> to vector<32x32xf32>
    %93 = arith.mulf %88, %92 : vector<32x32xf32>
    %94 = vector.extract_strided_slice %2 {offsets = [4, 0], sizes = [1, 32], strides = [1, 1]} : vector<6x32xf32> to vector<1x32xf32>
    %95 = vector.broadcast %94 : vector<1x32xf32> to vector<32x32xf32>
    %96 = arith.mulf %93, %95 : vector<32x32xf32>
    %97 = vector.extract_strided_slice %2 {offsets = [5, 0], sizes = [1, 32], strides = [1, 1]} : vector<6x32xf32> to vector<1x32xf32>
    %98 = vector.broadcast %97 : vector<1x32xf32> to vector<32x32xf32>
    %99 = arith.addf %96, %98 : vector<32x32xf32>
    %100 = arith.truncf %99 : vector<32x32xf32> to vector<32x32xbf16>
    %101 = vector.extract_strided_slice %1 {offsets = [0, 96], sizes = [32, 32], strides = [1, 1]} : vector<32x128xbf16> to vector<32x32xbf16>
    %cst_28 = arith.constant dense<0.000000e+00> : vector<32x32xf32>
    %102 = tpu.matmul %100, %101, %cst_28 {dimension_numbers = #tpu.dot_dimension_numbers<[1], [0], [0], [1], [0, 0, 1, 1], [], []>} : vector<32x32xbf16>, vector<32x32xbf16>, vector<32x32xf32> -> vector<32x32xf32>
    %103 = vector.extract_strided_slice %2 {offsets = [3, 0], sizes = [1, 32], strides = [1, 1]} : vector<6x32xf32> to vector<1x32xf32>
    %104 = vector.broadcast %103 : vector<1x32xf32> to vector<32x32xf32>
    %105 = arith.addf %102, %104 : vector<32x32xf32>
    %c0_29 = arith.constant 0 : index
    %c0_30 = arith.constant 0 : index
    %106 = vector.load %arg6[%c0_29, %c0_30] : memref<32x32xf32, #tpu.memory_space<vmem>>, vector<32x32xf32>
    tpu.vector_store %arg6[%c0_29, %c0_30], %105 {strides = array<i32>} : memref<32x32xf32, #tpu.memory_space<vmem>>, vector<32x32xf32>,
    return
  }
  func.func @transform_0(%arg0: i32) -> (i32, i32) {
    %c0_i32 = arith.constant 0 : i32
    %c0_i32_0 = arith.constant 0 : i32
    return %arg0, %c0_i32 : i32, i32
  }
  func.func @transform_1(%arg0: i32) -> (i32, i32) {
    %c0_i32 = arith.constant 0 : i32
    %c0_i32_0 = arith.constant 0 : i32
    return %arg0, %c0_i32 : i32, i32
  }
  func.func @transform_2(%arg0: i32) -> (i32, i32, i32) {
    %c0_i32 = arith.constant 0 : i32
    %c0_i32_0 = arith.constant 0 : i32
    %c0_i32_1 = arith.constant 0 : i32
    return %arg0, %c0_i32, %c0_i32_0 : i32, i32, i32
  }
  func.func @transform_3(%arg0: i32) -> (i32, i32) {
    %c0_i32 = arith.constant 0 : i32
    %c0_i32_0 = arith.constant 0 : i32
    %c0_i32_1 = arith.constant 0 : i32
    return %c0_i32, %c0_i32_0 : i32, i32
  }
  func.func @transform_4(%arg0: i32) -> (i32, i32) {
    %c0_i32 = arith.constant 0 : i32
    %c0_i32_0 = arith.constant 0 : i32
    %c0_i32_1 = arith.constant 0 : i32
    return %c0_i32, %c0_i32_0 : i32, i32
  }
  func.func @transform_5(%arg0: i32) -> (i32, i32) {
    %c0_i32 = arith.constant 0 : i32
    %c0_i32_0 = arith.constant 0 : i32
    return %arg0, %c0_i32 : i32, i32
  }
}

</mosaic_0001>

<llo_original>
// kernel: tpu_custom_call.1
$region0: #{tpu_custom_call.1}
  #allocation0 [shape = 'u32[]', space=smem, size = 0x4, offset = 0x4, fixed_abs, tag = 'smem constant byte address 0x4 - core index']
  #allocation1 [shape = 'u32[72,128]{1,0:T(1,128)}', space=vmem, size = 0x9000, scoped, tag = 'internal scratch']
  %s0 = inlined_call_operand.vmem [shape: f32[32,32], index: 0, kind: input, shape index: {}]
  %s1 = inlined_call_operand.vmem [shape: f32[64,32], index: 1, kind: input, shape index: {}]
  %s2 = inlined_call_operand.vmem [shape: f32[1,4,16], index: 2, kind: input, shape index: {}]
  %s3 = inlined_call_operand.vmem [shape: f32[32,128], index: 3, kind: input, shape index: {}]
  %s4 = inlined_call_operand.vmem [shape: f32[6,32], index: 4, kind: input, shape index: {}]
  %s5 = inlined_call_operand.hbm [shape: f32[32,32], index: 5, kind: output, shape index: {}]
  %s6 = sld [smem:[#allocation0]]
  $region30: #{tpu_custom_call.1} parent=0
    _
  %s8 = ssub.s32 1, %s6
  %s9 = scalar_select 0, %s8, %s6
  $region1: #{tpu_custom_call.1} parent=0
    #allocation2 [shape = 'u8[16384]{0}', space=vmem, size = 0x4000, scoped, tag = 'output window, operand 0, single buffered']
    #allocation3 [shape = 's32[1]{0}', space=sflag, size = 0x4, scoped, tag = 'scoped memory for tpu_custom_call.1']
    %10 = vsyncpa [#allocation3], 0
    // Predicated region
    $region2: #{tpu_custom_call.1} parent=1 // pred_check
      _
    $region3: #{tpu_custom_call.1} parent=1 // pred_check_branch
      %12 = sbr.rel (0) target = $region5
    $region4: #{tpu_custom_call.1} parent=1 // pred_region
      _
    $region5: #{tpu_custom_call.1} parent=1 // pred_fallthru
      _
    // Predicated region
    $region6: #{tpu_custom_call.1} parent=1 // pred_check
      _
    $region7: #{tpu_custom_call.1} parent=1 // pred_check_branch
      %14 = sbr.rel (0) target = $region9
    $region8: #{tpu_custom_call.1} parent=1 // pred_region
      _
    $region9: #{tpu_custom_call.1} parent=1 // pred_fallthru
      _
    // Predicated region
    $region10: #{tpu_custom_call.1} parent=1 // pred_check
      _
    $region11: #{tpu_custom_call.1} parent=1 // pred_check_branch
      %16 = sbr.rel (0) target = $region13
    $region12: #{tpu_custom_call.1} parent=1 // pred_region
      _
    $region13: #{tpu_custom_call.1} parent=1 // pred_fallthru
      _
    // Predicated region
    $region14: #{tpu_custom_call.1} parent=1 // pred_check
      _
    $region15: #{tpu_custom_call.1} parent=1 // pred_check_branch
      %18 = sbr.rel (0) target = $region17
    $region16: #{tpu_custom_call.1} parent=1 // pred_region
      _
    $region17: #{tpu_custom_call.1} parent=1 // pred_fallthru
      _
    // Predicated region
    $region18: #{tpu_custom_call.1} parent=1 // pred_check
      _
    $region19: #{tpu_custom_call.1} parent=1 // pred_check_branch
      %20 = sbr.rel (0) target = $region21
    $region20: #{tpu_custom_call.1} parent=1 // pred_region
      _
    $region21: #{tpu_custom_call.1} parent=1 // pred_fallthru
      _
    %v22 = vld [vmem:[%s3] sm:$0xff]
    %v23 = vld [vmem:[%s3 + $0x8] sm:$0xff]
    %v24 = vld [vmem:[%s3 + $0x10] sm:$0xff]
    %v25 = vld [vmem:[%s3 + $0x18] sm:$0xff]
    %v26 = vpack.c.bf16 %v22, %v22
    %v27 = vpack.c.bf16 %v23, %v23
    %v28 = vpack.c.bf16 %v24, %v24
    %v29 = vpack.c.bf16 %v25, %v25
    %v30 = vld [vmem:[%s4] sm:$0x3f]
    %v31 = vld [vmem:[%s0] sm:$0xff]
    %v32 = vld [vmem:[%s0 + $0x8] sm:$0xff]
    %v33 = vld [vmem:[%s0 + $0x10] sm:$0xff]
    %v34 = vld [vmem:[%s0 + $0x18] sm:$0xff]
    %v35 = vpack.c.bf16 %v32, %v31
    %v36 = vpack.c.bf16 %v34, %v33
    %v41 = vunpack.c.l.b16 %v26
    %v42 = vunpack.c.l.b16 %v27
    %v43 = vunpack.c.l.b16 %v28
    %v44 = vunpack.c.l.b16 %v29
    %v45 = vpack.c.b16 %v42, %v41
    %v46 = vpack.c.b16 %v44, %v43
    %vm49 = vcmask 261120
    %v51 = vsel %vm49, %v35, 0
    %v54 = vsel %vm49, %v36, 0
    %56 = vmatpush.bf16.msra.mxu0 0
    %57 = vmatpush.bf16.msra.mxu0 0
    %58 = vmatpush.bf16.msra.mxu0 0
    %59 = vmatpush.bf16.msra.mxu0 0
    %60 = vmatpush.bf16.msra.mxu0 0
    %61 = vmatpush.bf16.msra.mxu0 0
    %62 = vmatpush.bf16.msra.mxu0 %v46
    %63 = vmatpush.bf16.msra.mxu0 %v45
    %64 = vmatmul.bf16.gmra.mxu0 %v51
    %v65 = vpop.f32.mrf.mxu0
    %v66 = vadd.f32 0.0, %v65
    %v67 = vpop.f32.mrf.mxu0
    %v68 = vadd.f32 0.0, %v67
    %69 = vmatmul.bf16.gmra.mxu0 %v54
    %v70 = vpop.f32.mrf.mxu0
    %v71 = vadd.f32 0.0, %v70
    %v72 = vpop.f32.mrf.mxu0
    %v73 = vadd.f32 0.0, %v72
    %74 = vdwg.mxu0
    %v75 = vld [vmem:[%s1] sm:$0xff]
    %v76 = vld [vmem:[%s1 + $0x8] sm:$0xff]
    %v77 = vld [vmem:[%s1 + $0x10] sm:$0xff]
    %v78 = vld [vmem:[%s1 + $0x18] sm:$0xff]
    %v79 = vld [vmem:[%s1 + $0x20] sm:$0xff]
    %v80 = vld [vmem:[%s1 + $0x28] sm:$0xff]
    %v81 = vld [vmem:[%s1 + $0x30] sm:$0xff]
    %v82 = vld [vmem:[%s1 + $0x38] sm:$0xff]
    %v83 = vpack.c.bf16 %v76, %v75
    %v84 = vpack.c.bf16 %v78, %v77
    %v85 = vpack.c.bf16 %v80, %v79
    %v86 = vpack.c.bf16 %v82, %v81
    %v88 = vsel %vm49, %v83, 0
    %v91 = vsel %vm49, %v84, 0
    %v94 = vsel %vm49, %v85, 0
    %v97 = vsel %vm49, %v86, 0
    %99 = vmatpush.bf16.msra.mxu0 0
    %100 = vmatpush.bf16.msra.mxu0 0
    %101 = vmatpush.bf16.msra.mxu0 0
    %102 = vmatpush.bf16.msra.mxu0 0
    %103 = vmatpush.bf16.msra.mxu0 0
    %104 = vmatpush.bf16.msra.mxu0 0
    %105 = vmatpush.bf16.msra.mxu0 %v46
    %106 = vmatpush.bf16.msra.mxu0 %v45
    %107 = vmatmul.bf16.gmra.mxu0 %v88
    %v108 = vpop.f32.mrf.mxu0
    %v109 = vadd.f32 0.0, %v108
    %v110 = vpop.f32.mrf.mxu0
    %v111 = vadd.f32 0.0, %v110
    %112 = vmatmul.bf16.gmra.mxu0 %v91
    %v113 = vpop.f32.mrf.mxu0
    %v114 = vadd.f32 0.0, %v113
    %v115 = vpop.f32.mrf.mxu0
    %v116 = vadd.f32 0.0, %v115
    %117 = vmatmul.bf16.gmra.mxu0 %v94
    %v118 = vpop.f32.mrf.mxu0
    %v119 = vadd.f32 0.0, %v118
    %v120 = vpop.f32.mrf.mxu0
    %v121 = vadd.f32 0.0, %v120
    %122 = vmatmul.bf16.gmra.mxu0 %v97
    %v123 = vpop.f32.mrf.mxu0
    %v124 = vadd.f32 0.0, %v123
    %v125 = vpop.f32.mrf.mxu0
    %v126 = vadd.f32 0.0, %v125
    %127 = vdwg.mxu0
    %v128 = vperm.slane %v30, 0
    %v129 = vadd.f32 %v66, %v128
    %v130 = vadd.f32 %v68, %v128
    %v131 = vadd.f32 %v71, %v128
    %v132 = vadd.f32 %v73, %v128
    %v133 = vmul.f32 %v129, 0.25
    %v134 = vmul.f32 %v130, 0.25
    %v135 = vmul.f32 %v131, 0.25
    %v136 = vmul.f32 %v132, 0.25
    %v137 = vpack.c.bf16 %v133, %v133
    %v138 = vpack.c.bf16 %v134, %v134
    %v139 = vpack.c.bf16 %v135, %v135
    %v140 = vpack.c.bf16 %v136, %v136
    %v141 = vperm.slane %v30, 1
    %143 = vrot.lane.b32.xlu0 %v141, 32
    %v144 = vpop.permute.xlu0 %143
    %v146 = vadd.f32 %v109, %v144
    %v147 = vadd.f32 %v111, %v144
    %v148 = vadd.f32 %v114, %v144
    %v149 = vadd.f32 %v116, %v144
    %v150 = vadd.f32 %v119, %v144
    %v151 = vadd.f32 %v121, %v144
    %v152 = vadd.f32 %v124, %v144
    %v153 = vadd.f32 %v126, %v144
    %v154 = vpack.c.bf16 %v146, %v146
    %v155 = vpack.c.bf16 %v147, %v147
    %v156 = vpack.c.bf16 %v148, %v148
    %v157 = vpack.c.bf16 %v149, %v149
    %v158 = vpack.c.bf16 %v150, %v150
    %v159 = vpack.c.bf16 %v151, %v151
    %v160 = vpack.c.bf16 %v152, %v152
    %v161 = vpack.c.bf16 %v153, %v153
    %v162 = vperm.slane %v30, 2
    %164 = vrot.lane.b32.xlu0 %v162, 64
    %v165 = vpop.permute.xlu0 %164
    %v167 = vadd.f32 %v109, %v165
    %v168 = vadd.f32 %v111, %v165
    %v169 = vadd.f32 %v114, %v165
    %v170 = vadd.f32 %v116, %v165
    %v171 = vadd.f32 %v119, %v165
    %v172 = vadd.f32 %v121, %v165
    %v173 = vadd.f32 %v124, %v165
    %v174 = vadd.f32 %v126, %v165
    %v175 = vpack.c.bf16 %v167, %v167
    %v176 = vpack.c.bf16 %v168, %v168
    %v177 = vpack.c.bf16 %v169, %v169
    %v178 = vpack.c.bf16 %v170, %v170
    %v179 = vpack.c.bf16 %v171, %v171
    %v180 = vpack.c.bf16 %v172, %v172
    %v181 = vpack.c.bf16 %v173, %v173
    %v182 = vpack.c.bf16 %v174, %v174
    %v183 = vld [vmem:[%s2] sm:$0xf]
    %v184 = vsub.f32 %v183, 1.0
    %v185 = vmul.f32 %v184, 1e+30
    %v187 = vrot.slane %v185, 1
    %v188 = vrot.slane %v185, 2
    %v189 = vrot.slane %v185, 3
    %v190 = vperm.slane %v185, 0
    %v191 = vperm.slane %v187, 0
    %v192 = vperm.slane %v188, 0
    %v193 = vperm.slane %v189, 0
    %v200 = vunpack.c.l.b16 %v154
    %v201 = vunpack.c.l.b16 %v155
    %v202 = vpack.c.b16 %v201, %v200
    %203 = vrot.lane.b32.xlu0 %v202, 96
    %v204 = vpop.permute.xlu0 %203
    %vm205 = vcmask 130048
    %v207 = vsel %vm205, %v137, 0
    %v210 = vsel %vm205, %v204, 0
    %212 = vmatpush.bf16.xpose.msra.mxu0 0
    %213 = vmatpush.bf16.xpose.msra.mxu0 0
    %214 = vmatpush.bf16.xpose.msra.mxu0 0
    %215 = vmatpush.bf16.xpose.msra.mxu0 0
    %216 = vmatpush.bf16.xpose.msra.mxu0 0
    %217 = vmatpush.bf16.xpose.msra.mxu0 0
    %218 = vmatpush.bf16.xpose.msra.mxu0 0
    %219 = vmatpush.bf16.xpose.msra.mxu0 %v210
    %220 = vmatmul.bf16.gmra.mxu0 %v207
    %v221 = vpop.f32.mrf.mxu0
    %v222 = vadd.f32 %v190, %v221
    %v223 = vpop.f32.mrf.mxu0
    %224 = vdwg.mxu0
    %v227 = vunpack.c.l.b16 %v156
    %v228 = vunpack.c.l.b16 %v157
    %v229 = vpack.c.b16 %v228, %v227
    %230 = vrot.lane.b32.xlu0 %v229, 96
    %v231 = vpop.permute.xlu0 %230
    %v233 = vsel %vm205, %v138, 0
    %v236 = vsel %vm205, %v231, 0
    %238 = vmatpush.bf16.xpose.msra.mxu0 0
    %239 = vmatpush.bf16.xpose.msra.mxu0 0
    %240 = vmatpush.bf16.xpose.msra.mxu0 0
    %241 = vmatpush.bf16.xpose.msra.mxu0 0
    %242 = vmatpush.bf16.xpose.msra.mxu0 0
    %243 = vmatpush.bf16.xpose.msra.mxu0 0
    %244 = vmatpush.bf16.xpose.msra.mxu0 0
    %245 = vmatpush.bf16.xpose.msra.mxu0 %v236
    %246 = vmatmul.bf16.gmra.mxu0 %v233
    %v247 = vpop.f32.mrf.mxu0
    %v248 = vadd.f32 %v191, %v247
    %v249 = vpop.f32.mrf.mxu0
    %250 = vdwg.mxu0
    %v253 = vunpack.c.l.b16 %v158
    %v254 = vunpack.c.l.b16 %v159
    %v255 = vpack.c.b16 %v254, %v253
    %256 = vrot.lane.b32.xlu0 %v255, 96
    %v257 = vpop.permute.xlu0 %256
    %v259 = vsel %vm205, %v139, 0
    %v262 = vsel %vm205, %v257, 0
    %264 = vmatpush.bf16.xpose.msra.mxu0 0
    %265 = vmatpush.bf16.xpose.msra.mxu0 0
    %266 = vmatpush.bf16.xpose.msra.mxu0 0
    %267 = vmatpush.bf16.xpose.msra.mxu0 0
    %268 = vmatpush.bf16.xpose.msra.mxu0 0
    %269 = vmatpush.bf16.xpose.msra.mxu0 0
    %270 = vmatpush.bf16.xpose.msra.mxu0 0
    %271 = vmatpush.bf16.xpose.msra.mxu0 %v262
    %272 = vmatmul.bf16.gmra.mxu0 %v259
    %v273 = vpop.f32.mrf.mxu0
    %v274 = vadd.f32 %v192, %v273
    %v275 = vpop.f32.mrf.mxu0
    %276 = vdwg.mxu0
    %v279 = vunpack.c.l.b16 %v160
    %v280 = vunpack.c.l.b16 %v161
    %v281 = vpack.c.b16 %v280, %v279
    %282 = vrot.lane.b32.xlu0 %v281, 96
    %v283 = vpop.permute.xlu0 %282
    %v285 = vsel %vm205, %v140, 0
    %v288 = vsel %vm205, %v283, 0
    %290 = vmatpush.bf16.xpose.msra.mxu0 0
    %291 = vmatpush.bf16.xpose.msra.mxu0 0
    %292 = vmatpush.bf16.xpose.msra.mxu0 0
    %293 = vmatpush.bf16.xpose.msra.mxu0 0
    %294 = vmatpush.bf16.xpose.msra.mxu0 0
    %295 = vmatpush.bf16.xpose.msra.mxu0 0
    %296 = vmatpush.bf16.xpose.msra.mxu0 0
    %297 = vmatpush.bf16.xpose.msra.mxu0 %v288
    %298 = vmatmul.bf16.gmra.mxu0 %v285
    %v299 = vpop.f32.mrf.mxu0
    %v300 = vadd.f32 %v193, %v299
    %v301 = vpop.f32.mrf.mxu0
    %302 = vdwg.mxu0
    %v303 = vsel %vm205, %v222, -inf
    %304 = vmax.xlane.f32.xlu0 %v303
    %v305 = vpop.xlane.xlu0 %304
    %v306 = vsel %vm205, %v248, -inf
    %307 = vmax.xlane.f32.xlu0 %v306
    %v308 = vpop.xlane.xlu0 %307
    %v309 = vsel %vm205, %v274, -inf
    %310 = vmax.xlane.f32.xlu0 %v309
    %v311 = vpop.xlane.xlu0 %310
    %v312 = vsel %vm205, %v300, -inf
    %313 = vmax.xlane.f32.xlu0 %v312
    %v314 = vpop.xlane.xlu0 %313
    %v315 = vsub.f32 %v222, %v305
    %v316 = vsub.f32 %v248, %v308
    %v317 = vsub.f32 %v274, %v311
    %v318 = vsub.f32 %v300, %v314
    %v319 = vmul.f32 %v315, 1.442695
    %v320 = vpow.pop %v319
    %v321 = vmul.f32 %v316, 1.442695
    %v322 = vpow.pop %v321
    %v323 = vmul.f32 %v317, 1.442695
    %v324 = vpow.pop %v323
    %v325 = vmul.f32 %v318, 1.442695
    %v326 = vpow.pop %v325
    %v327 = vsel %vm205, %v320, 0.0
    %328 = vadd.xlane.f32.xlu0 %v327
    %v329 = vpop.xlane.xlu0 %328
    %v330 = vsel %vm205, %v322, 0.0
    %331 = vadd.xlane.f32.xlu0 %v330
    %v332 = vpop.xlane.xlu0 %331
    %v333 = vsel %vm205, %v324, 0.0
    %334 = vadd.xlane.f32.xlu0 %v333
    %v335 = vpop.xlane.xlu0 %334
    %v336 = vsel %vm205, %v326, 0.0
    %337 = vadd.xlane.f32.xlu0 %v336
    %v338 = vpop.xlane.xlu0 %337
    %v339 = vrcp.pop %v329
    %v340 = vrcp.pop %v332
    %v341 = vrcp.pop %v335
    %v342 = vrcp.pop %v338
    %v343 = vmul.f32 %v320, %v339
    %v344 = vmul.f32 %v322, %v340
    %v345 = vmul.f32 %v324, %v341
    %v346 = vmul.f32 %v326, %v342
    %v347 = vpack.c.bf16 %v343, %v343
    %v348 = vpack.c.bf16 %v344, %v344
    %v349 = vpack.c.bf16 %v345, %v345
    %v350 = vpack.c.bf16 %v346, %v346
    %v353 = vunpack.c.l.b16 %v175
    %v354 = vunpack.c.l.b16 %v176
    %v355 = vpack.c.b16 %v354, %v353
    %356 = vrot.lane.b32.xlu0 %v355, 64
    %v357 = vpop.permute.xlu0 %356
    %v360 = vsel %vm205, %v347, 0
    %362 = vmatpush.bf16.msra.mxu0 0
    %363 = vmatpush.bf16.msra.mxu0 0
    %364 = vmatpush.bf16.msra.mxu0 0
    %365 = vmatpush.bf16.msra.mxu0 0
    %366 = vmatpush.bf16.msra.mxu0 0
    %367 = vmatpush.bf16.msra.mxu0 0
    %368 = vmatpush.bf16.msra.mxu0 0
    %369 = vmatpush.bf16.msra.mxu0 %v357
    %370 = vmatmul.bf16.gmra.mxu0 %v360
    %v371 = vpop.f32.mrf.mxu0
    %v372 = vadd.f32 0.0, %v371
    %v373 = vpop.f32.mrf.mxu0
    %374 = vdwg.mxu0
    %v377 = vunpack.c.l.b16 %v177
    %v378 = vunpack.c.l.b16 %v178
    %v379 = vpack.c.b16 %v378, %v377
    %380 = vrot.lane.b32.xlu0 %v379, 64
    %v381 = vpop.permute.xlu0 %380
    %v384 = vsel %vm205, %v348, 0
    %386 = vmatpush.bf16.msra.mxu0 0
    %387 = vmatpush.bf16.msra.mxu0 0
    %388 = vmatpush.bf16.msra.mxu0 0
    %389 = vmatpush.bf16.msra.mxu0 0
    %390 = vmatpush.bf16.msra.mxu0 0
    %391 = vmatpush.bf16.msra.mxu0 0
    %392 = vmatpush.bf16.msra.mxu0 0
    %393 = vmatpush.bf16.msra.mxu0 %v381
    %394 = vmatmul.bf16.gmra.mxu0 %v384
    %v395 = vpop.f32.mrf.mxu0
    %v396 = vadd.f32 0.0, %v395
    %v397 = vpop.f32.mrf.mxu0
    %398 = vdwg.mxu0
    %v401 = vunpack.c.l.b16 %v179
    %v402 = vunpack.c.l.b16 %v180
    %v403 = vpack.c.b16 %v402, %v401
    %404 = vrot.lane.b32.xlu0 %v403, 64
    %v405 = vpop.permute.xlu0 %404
    %v408 = vsel %vm205, %v349, 0
    %410 = vmatpush.bf16.msra.mxu0 0
    %411 = vmatpush.bf16.msra.mxu0 0
    %412 = vmatpush.bf16.msra.mxu0 0
    %413 = vmatpush.bf16.msra.mxu0 0
    %414 = vmatpush.bf16.msra.mxu0 0
    %415 = vmatpush.bf16.msra.mxu0 0
    %416 = vmatpush.bf16.msra.mxu0 0
    %417 = vmatpush.bf16.msra.mxu0 %v405
    %418 = vmatmul.bf16.gmra.mxu0 %v408
    %v419 = vpop.f32.mrf.mxu0
    %v420 = vadd.f32 0.0, %v419
    %v421 = vpop.f32.mrf.mxu0
    %422 = vdwg.mxu0
    %v425 = vunpack.c.l.b16 %v181
    %v426 = vunpack.c.l.b16 %v182
    %v427 = vpack.c.b16 %v426, %v425
    %428 = vrot.lane.b32.xlu0 %v427, 64
    %v429 = vpop.permute.xlu0 %428
    %v432 = vsel %vm205, %v350, 0
    %434 = vmatpush.bf16.msra.mxu0 0
    %435 = vmatpush.bf16.msra.mxu0 0
    %436 = vmatpush.bf16.msra.mxu0 0
    %437 = vmatpush.bf16.msra.mxu0 0
    %438 = vmatpush.bf16.msra.mxu0 0
    %439 = vmatpush.bf16.msra.mxu0 0
    %440 = vmatpush.bf16.msra.mxu0 0
    %441 = vmatpush.bf16.msra.mxu0 %v429
    %442 = vmatmul.bf16.gmra.mxu0 %v432
    %v443 = vpop.f32.mrf.mxu0
    %v444 = vadd.f32 0.0, %v443
    %v445 = vpop.f32.mrf.mxu0
    %446 = vdwg.mxu0
    %v448 = vunpack.c.l.b16 %v137
    %v449 = vpack.c.b16 %v448, %v448
    %450 = vrot.lane.b32.xlu0 %v449, 112
    %v451 = vpop.permute.xlu0 %450
    %452 = vrot.lane.b32.xlu0 %v202, 80
    %v453 = vpop.permute.xlu0 %452
    %v455 = vsel %vm205, %v451, 0
    %v458 = vsel %vm205, %v453, 0
    %460 = vmatpush.bf16.xpose.msra.mxu0 0
    %461 = vmatpush.bf16.xpose.msra.mxu0 0
    %462 = vmatpush.bf16.xpose.msra.mxu0 0
    %463 = vmatpush.bf16.xpose.msra.mxu0 0
    %464 = vmatpush.bf16.xpose.msra.mxu0 0
    %465 = vmatpush.bf16.xpose.msra.mxu0 0
    %466 = vmatpush.bf16.xpose.msra.mxu0 0
    %467 = vmatpush.bf16.xpose.msra.mxu0 %v458
    %468 = vmatmul.bf16.gmra.mxu0 %v455
    %v469 = vpop.f32.mrf.mxu0
    %v470 = vadd.f32 %v190, %v469
    %v471 = vpop.f32.mrf.mxu0
    %472 = vdwg.mxu0
    %v474 = vunpack.c.l.b16 %v138
    %v475 = vpack.c.b16 %v474, %v474
    %476 = vrot.lane.b32.xlu0 %v475, 112
    %v477 = vpop.permute.xlu0 %476
    %478 = vrot.lane.b32.xlu0 %v229, 80
    %v479 = vpop.permute.xlu0 %478
    %v481 = vsel %vm205, %v477, 0
    %v484 = vsel %vm205, %v479, 0
    %486 = vmatpush.bf16.xpose.msra.mxu0 0
    %487 = vmatpush.bf16.xpose.msra.mxu0 0
    %488 = vmatpush.bf16.xpose.msra.mxu0 0
    %489 = vmatpush.bf16.xpose.msra.mxu0 0
    %490 = vmatpush.bf16.xpose.msra.mxu0 0
    %491 = vmatpush.bf16.xpose.msra.mxu0 0
    %492 = vmatpush.bf16.xpose.msra.mxu0 0
    %493 = vmatpush.bf16.xpose.msra.mxu0 %v484
    %494 = vmatmul.bf16.gmra.mxu0 %v481
    %v495 = vpop.f32.mrf.mxu0
    %v496 = vadd.f32 %v191, %v495
    %v497 = vpop.f32.mrf.mxu0
    %498 = vdwg.mxu0
    %v500 = vunpack.c.l.b16 %v139
    %v501 = vpack.c.b16 %v500, %v500
    %502 = vrot.lane.b32.xlu0 %v501, 112
    %v503 = vpop.permute.xlu0 %502
    %504 = vrot.lane.b32.xlu0 %v255, 80
    %v505 = vpop.permute.xlu0 %504
    %v507 = vsel %vm205, %v503, 0
    %v510 = vsel %vm205, %v505, 0
    %512 = vmatpush.bf16.xpose.msra.mxu0 0
    %513 = vmatpush.bf16.xpose.msra.mxu0 0
    %514 = vmatpush.bf16.xpose.msra.mxu0 0
    %515 = vmatpush.bf16.xpose.msra.mxu0 0
    %516 = vmatpush.bf16.xpose.msra.mxu0 0
    %517 = vmatpush.bf16.xpose.msra.mxu0 0
    %518 = vmatpush.bf16.xpose.msra.mxu0 0
    %519 = vmatpush.bf16.xpose.msra.mxu0 %v510
    %520 = vmatmul.bf16.gmra.mxu0 %v507
    %v521 = vpop.f32.mrf.mxu0
    %v522 = vadd.f32 %v192, %v521
    %v523 = vpop.f32.mrf.mxu0
    %524 = vdwg.mxu0
    %v526 = vunpack.c.l.b16 %v140
    %v527 = vpack.c.b16 %v526, %v526
    %528 = vrot.lane.b32.xlu0 %v527, 112
    %v529 = vpop.permute.xlu0 %528
    %530 = vrot.lane.b32.xlu0 %v281, 80
    %v531 = vpop.permute.xlu0 %530
    %v533 = vsel %vm205, %v529, 0
    %v536 = vsel %vm205, %v531, 0
    %538 = vmatpush.bf16.xpose.msra.mxu0 0
    %539 = vmatpush.bf16.xpose.msra.mxu0 0
    %540 = vmatpush.bf16.xpose.msra.mxu0 0
    %541 = vmatpush.bf16.xpose.msra.mxu0 0
    %542 = vmatpush.bf16.xpose.msra.mxu0 0
    %543 = vmatpush.bf16.xpose.msra.mxu0 0
    %544 = vmatpush.bf16.xpose.msra.mxu0 0
    %545 = vmatpush.bf16.xpose.msra.mxu0 %v536
    %546 = vmatmul.bf16.gmra.mxu0 %v533
    %v547 = vpop.f32.mrf.mxu0
    %v548 = vadd.f32 %v193, %v547
    %v549 = vpop.f32.mrf.mxu0
    %550 = vdwg.mxu0
    %v551 = vsel %vm205, %v470, -inf
    %552 = vmax.xlane.f32.xlu0 %v551
    %v553 = vpop.xlane.xlu0 %552
    %v554 = vsel %vm205, %v496, -inf
    %555 = vmax.xlane.f32.xlu0 %v554
    %v556 = vpop.xlane.xlu0 %555
    %v557 = vsel %vm205, %v522, -inf
    %558 = vmax.xlane.f32.xlu0 %v557
    %v559 = vpop.xlane.xlu0 %558
    %v560 = vsel %vm205, %v548, -inf
    %561 = vmax.xlane.f32.xlu0 %v560
    %v562 = vpop.xlane.xlu0 %561
    %v563 = vsub.f32 %v470, %v553
    %v564 = vsub.f32 %v496, %v556
    %v565 = vsub.f32 %v522, %v559
    %v566 = vsub.f32 %v548, %v562
    %v567 = vmul.f32 %v563, 1.442695
    %v568 = vpow.pop %v567
    %v569 = vmul.f32 %v564, 1.442695
    %v570 = vpow.pop %v569
    %v571 = vmul.f32 %v565, 1.442695
    %v572 = vpow.pop %v571
    %v573 = vmul.f32 %v566, 1.442695
    %v574 = vpow.pop %v573
    %v575 = vsel %vm205, %v568, 0.0
    %576 = vadd.xlane.f32.xlu0 %v575
    %v577 = vpop.xlane.xlu0 %576
    %v578 = vsel %vm205, %v570, 0.0
    %579 = vadd.xlane.f32.xlu0 %v578
    %v580 = vpop.xlane.xlu0 %579
    %v581 = vsel %vm205, %v572, 0.0
    %582 = vadd.xlane.f32.xlu0 %v581
    %v583 = vpop.xlane.xlu0 %582
    %v584 = vsel %vm205, %v574, 0.0
    %585 = vadd.xlane.f32.xlu0 %v584
    %v586 = vpop.xlane.xlu0 %585
    %v587 = vrcp.pop %v577
    %v588 = vrcp.pop %v580
    %v589 = vrcp.pop %v583
    %v590 = vrcp.pop %v586
    %v591 = vmul.f32 %v568, %v587
    %v592 = vmul.f32 %v570, %v588
    %v593 = vmul.f32 %v572, %v589
    %v594 = vmul.f32 %v574, %v590
    %v595 = vpack.c.bf16 %v591, %v591
    %v596 = vpack.c.bf16 %v592, %v592
    %v597 = vpack.c.bf16 %v593, %v593
    %v598 = vpack.c.bf16 %v594, %v594
    %599 = vrot.lane.b32.xlu0 %v355, 48
    %v600 = vpop.permute.xlu0 %599
    %v603 = vsel %vm205, %v595, 0
    %605 = vmatpush.bf16.msra.mxu0 0
    %606 = vmatpush.bf16.msra.mxu0 0
    %607 = vmatpush.bf16.msra.mxu0 0
    %608 = vmatpush.bf16.msra.mxu0 0
    %609 = vmatpush.bf16.msra.mxu0 0
    %610 = vmatpush.bf16.msra.mxu0 0
    %611 = vmatpush.bf16.msra.mxu0 0
    %612 = vmatpush.bf16.msra.mxu0 %v600
    %613 = vmatmul.bf16.gmra.mxu0 %v603
    %v614 = vpop.f32.mrf.mxu0
    %v615 = vadd.f32 0.0, %v614
    %v616 = vpop.f32.mrf.mxu0
    %617 = vdwg.mxu0
    %618 = vrot.lane.b32.xlu0 %v379, 48
    %v619 = vpop.permute.xlu0 %618
    %v622 = vsel %vm205, %v596, 0
    %624 = vmatpush.bf16.msra.mxu0 0
    %625 = vmatpush.bf16.msra.mxu0 0
    %626 = vmatpush.bf16.msra.mxu0 0
    %627 = vmatpush.bf16.msra.mxu0 0
    %628 = vmatpush.bf16.msra.mxu0 0
    %629 = vmatpush.bf16.msra.mxu0 0
    %630 = vmatpush.bf16.msra.mxu0 0
    %631 = vmatpush.bf16.msra.mxu0 %v619
    %632 = vmatmul.bf16.gmra.mxu0 %v622
    %v633 = vpop.f32.mrf.mxu0
    %v634 = vadd.f32 0.0, %v633
    %v635 = vpop.f32.mrf.mxu0
    %636 = vdwg.mxu0
    %637 = vrot.lane.b32.xlu0 %v403, 48
    %v638 = vpop.permute.xlu0 %637
    %v641 = vsel %vm205, %v597, 0
    %643 = vmatpush.bf16.msra.mxu0 0
    %644 = vmatpush.bf16.msra.mxu0 0
    %645 = vmatpush.bf16.msra.mxu0 0
    %646 = vmatpush.bf16.msra.mxu0 0
    %647 = vmatpush.bf16.msra.mxu0 0
    %648 = vmatpush.bf16.msra.mxu0 0
    %649 = vmatpush.bf16.msra.mxu0 0
    %650 = vmatpush.bf16.msra.mxu0 %v638
    %651 = vmatmul.bf16.gmra.mxu0 %v641
    %v652 = vpop.f32.mrf.mxu0
    %v653 = vadd.f32 0.0, %v652
    %v654 = vpop.f32.mrf.mxu0
    %655 = vdwg.mxu0
    %656 = vrot.lane.b32.xlu0 %v427, 48
    %v657 = vpop.permute.xlu0 %656
    %v660 = vsel %vm205, %v598, 0
    %662 = vmatpush.bf16.msra.mxu0 0
    %663 = vmatpush.bf16.msra.mxu0 0
    %664 = vmatpush.bf16.msra.mxu0 0
    %665 = vmatpush.bf16.msra.mxu0 0
    %666 = vmatpush.bf16.msra.mxu0 0
    %667 = vmatpush.bf16.msra.mxu0 0
    %668 = vmatpush.bf16.msra.mxu0 0
    %669 = vmatpush.bf16.msra.mxu0 %v657
    %670 = vmatmul.bf16.gmra.mxu0 %v660
    %v671 = vpop.f32.mrf.mxu0
    %v672 = vadd.f32 0.0, %v671
    %v673 = vpop.f32.mrf.mxu0
    %674 = vdwg.mxu0
    %679 = vrot.lane.b32.xlu0 %v615, 16
    %v680 = vpop.permute.xlu0 %679
    %681 = vrot.lane.b32.xlu0 %v634, 16
    %v682 = vpop.permute.xlu0 %681
    %683 = vrot.lane.b32.xlu0 %v653, 16
    %v684 = vpop.permute.xlu0 %683
    %685 = vrot.lane.b32.xlu0 %v672, 16
    %v686 = vpop.permute.xlu0 %685
    %v691 = vsel %vm205, %v372, %v680
    %v692 = vsel %vm205, %v396, %v682
    %v693 = vsel %vm205, %v420, %v684
    %v694 = vsel %vm205, %v444, %v686
    %v695 = vsel %vm49, %v691, 0.0
    %696 = vadd.xlane.f32.xlu0 %v695
    %v697 = vpop.xlane.xlu0 %696
    %v698 = vsel %vm49, %v692, 0.0
    %699 = vadd.xlane.f32.xlu0 %v698
    %v700 = vpop.xlane.xlu0 %699
    %v701 = vsel %vm49, %v693, 0.0
    %702 = vadd.xlane.f32.xlu0 %v701
    %v703 = vpop.xlane.xlu0 %702
    %v704 = vsel %vm49, %v694, 0.0
    %705 = vadd.xlane.f32.xlu0 %v704
    %v706 = vpop.xlane.xlu0 %705
    %v707 = vrcp.pop 32.0
    %v708 = vmul.f32 32.0, %v707
    %v709 = vsub.f32 1.0, %v708
    %v710 = vmul.f32 %v707, %v709
    %v711 = vadd.f32 %v707, %v710
    %vm712 = vweird.f32 %v707
    %v713 = vsel %vm712, %v707, %v711
    %v714 = vmul.f32 %v697, %v713
    %v715 = vmul.f32 %v700, %v713
    %v716 = vmul.f32 %v703, %v713
    %v717 = vmul.f32 %v706, %v713
    %v718 = vmul.f32 %v691, %v691
    %v719 = vmul.f32 %v692, %v692
    %v720 = vmul.f32 %v693, %v693
    %v721 = vmul.f32 %v694, %v694
    %v722 = vsel %vm49, %v718, 0.0
    %723 = vadd.xlane.f32.xlu0 %v722
    %v724 = vpop.xlane.xlu0 %723
    %v725 = vsel %vm49, %v719, 0.0
    %726 = vadd.xlane.f32.xlu0 %v725
    %v727 = vpop.xlane.xlu0 %726
    %v728 = vsel %vm49, %v720, 0.0
    %729 = vadd.xlane.f32.xlu0 %v728
    %v730 = vpop.xlane.xlu0 %729
    %v731 = vsel %vm49, %v721, 0.0
    %732 = vadd.xlane.f32.xlu0 %v731
    %v733 = vpop.xlane.xlu0 %732
    %v734 = vmul.f32 %v724, %v713
    %v735 = vmul.f32 %v727, %v713
    %v736 = vmul.f32 %v730, %v713
    %v737 = vmul.f32 %v733, %v713
    %v738 = vmul.f32 %v714, %v714
    %v739 = vmul.f32 %v715, %v715
    %v740 = vmul.f32 %v716, %v716
    %v741 = vmul.f32 %v717, %v717
    %v742 = vsub.f32 %v734, %v738
    %v743 = vsub.f32 %v735, %v739
    %v744 = vsub.f32 %v736, %v740
    %v745 = vsub.f32 %v737, %v741
    %v746 = vmax.f32 %v742, 0.0
    %v747 = vmax.f32 %v743, 0.0
    %v748 = vmax.f32 %v744, 0.0
    %v749 = vmax.f32 %v745, 0.0
    %v750 = vsub.f32 %v691, %v714
    %v751 = vsub.f32 %v692, %v715
    %v752 = vsub.f32 %v693, %v716
    %v753 = vsub.f32 %v694, %v717
    %v754 = vadd.f32 %v746, 1e-05
    %v755 = vadd.f32 %v747, 1e-05
    %v756 = vadd.f32 %v748, 1e-05
    %v757 = vadd.f32 %v749, 1e-05
    %v758 = vrsqrt.pop %v754
    %v759 = vmul.f32 %v758, %v754
    %v760 = vmul.f32 %v759, %v758
    %v761 = vmul.f32 0.5, %v760
    %v762 = vsub.f32 1.5, %v761
    %v763 = vmul.f32 %v758, %v762
    %vm764 = vweird.f32 %v754
    %vm765 = vweird.f32 %v758
    %vm766 = vmor %vm764, %vm765
    %v767 = vsel %vm766, %v758, %v763
    %v768 = vrsqrt.pop %v755
    %v769 = vmul.f32 %v768, %v755
    %v770 = vmul.f32 %v769, %v768
    %v771 = vmul.f32 0.5, %v770
    %v772 = vsub.f32 1.5, %v771
    %v773 = vmul.f32 %v768, %v772
    %vm774 = vweird.f32 %v755
    %vm775 = vweird.f32 %v768
    %vm776 = vmor %vm774, %vm775
    %v777 = vsel %vm776, %v768, %v773
    %v778 = vrsqrt.pop %v756
    %v779 = vmul.f32 %v778, %v756
    %v780 = vmul.f32 %v779, %v778
    %v781 = vmul.f32 0.5, %v780
    %v782 = vsub.f32 1.5, %v781
    %v783 = vmul.f32 %v778, %v782
    %vm784 = vweird.f32 %v756
    %vm785 = vweird.f32 %v778
    %vm786 = vmor %vm784, %vm785
    %v787 = vsel %vm786, %v778, %v783
    %v788 = vrsqrt.pop %v757
    %v789 = vmul.f32 %v788, %v757
    %v790 = vmul.f32 %v789, %v788
    %v791 = vmul.f32 0.5, %v790
    %v792 = vsub.f32 1.5, %v791
    %v793 = vmul.f32 %v788, %v792
    %vm794 = vweird.f32 %v757
    %vm795 = vweird.f32 %v788
    %vm796 = vmor %vm794, %vm795
    %v797 = vsel %vm796, %v788, %v793
    %v798 = vmul.f32 %v750, %v767
    %v799 = vmul.f32 %v751, %v777
    %v800 = vmul.f32 %v752, %v787
    %v801 = vmul.f32 %v753, %v797
    %v802 = vperm.slane %v30, 4
    %v803 = vmul.f32 %v798, %v802
    %v804 = vmul.f32 %v799, %v802
    %v805 = vmul.f32 %v800, %v802
    %v806 = vmul.f32 %v801, %v802
    %v807 = vperm.slane %v30, 5
    %v808 = vadd.f32 %v803, %v807
    %v809 = vadd.f32 %v804, %v807
    %v810 = vadd.f32 %v805, %v807
    %v811 = vadd.f32 %v806, %v807
    %v812 = vpack.c.bf16 %v809, %v808
    %v813 = vpack.c.bf16 %v811, %v810
    %v814 = vperm.slane %v30, 3
    %815 = vrot.lane.b32.xlu0 %v45, 32
    %v816 = vpop.permute.xlu0 %815
    %817 = vrot.lane.b32.xlu0 %v46, 32
    %v818 = vpop.permute.xlu0 %817
    %v822 = vsel %vm49, %v812, 0
    %v825 = vsel %vm49, %v813, 0
    %827 = vmatpush.bf16.msra.mxu0 0
    %828 = vmatpush.bf16.msra.mxu0 0
    %829 = vmatpush.bf16.msra.mxu0 0
    %830 = vmatpush.bf16.msra.mxu0 0
    %831 = vmatpush.bf16.msra.mxu0 0
    %832 = vmatpush.bf16.msra.mxu0 0
    %833 = vmatpush.bf16.msra.mxu0 %v818
    %834 = vmatpush.bf16.msra.mxu0 %v816
    %835 = vmatmul.bf16.gmra.mxu0 %v822
    %v836 = vpop.f32.mrf.mxu0
    %v837 = vadd.f32 %v814, %v836
    %v838 = vpop.f32.mrf.mxu0
    %v839 = vadd.f32 %v814, %v838
    %840 = vmatmul.bf16.gmra.mxu0 %v825
    %v841 = vpop.f32.mrf.mxu0
    %v842 = vadd.f32 %v814, %v841
    %v843 = vpop.f32.mrf.mxu0
    %v844 = vadd.f32 %v814, %v843
    %845 = vdwg.mxu0
    %846 = vst.msk [vmem:[#allocation2] sm:$0xff] %vm49, %v837
    %847 = vst.msk [vmem:[#allocation2 + $0x8] sm:$0xff] %vm49, %v839
    %848 = vst.msk [vmem:[#allocation2 + $0x10] sm:$0xff] %vm49, %v842
    %849 = vst.msk [vmem:[#allocation2 + $0x18] sm:$0xff] %vm49, %v844
    // Predicated region
    $region22: #{tpu_custom_call.1} parent=1 // pred_check
      _
    $region23: #{tpu_custom_call.1} parent=1 // pred_check_branch
      %851 = sbr.rel (0) target = $region25
    $region24: #{tpu_custom_call.1} parent=1 // pred_region
      %853 = vsyncadd [#allocation3], 0
      %s854 = sshll.u32 [#allocation2], 4
      %s855 = int_to_ptr.vmem [resolvable:$true] %s854
      %s856 = sshll.u32 %s5, 4
      %s857 = int_to_ptr.hbm [resolvable:$true] %s856
      %862 = dma.vmem_to_hbm [thread:$0]  %s855, 512, %s857, [#allocation3], 128, 128, 8
    $region25: #{tpu_custom_call.1} parent=1 // pred_fallthru
      _
    // Predicated region
    $region26: #{tpu_custom_call.1} parent=1 // pred_check
      _
    $region27: #{tpu_custom_call.1} parent=1 // pred_check_branch
      %864 = sbr.rel (0) target = $region29
    $region28: #{tpu_custom_call.1} parent=1 // pred_region
      %866 = dma.done [#allocation3], 512
    $region29: #{tpu_custom_call.1} parent=1 // pred_fallthru
      _
    %867 = vsyncpa [#allocation3], 1

</llo_original>
